<compile_context>
chip_gen: v5e
topology: v5e:2x2
jax: 0.10.0
libtpu: 0.0.40
codegen_flags: <defaults>
</compile_context>

<pallas_src>
import jax
import jax.numpy as jnp
from jax import lax
from jax.experimental import pallas as pl
from jax.experimental.pallas import tpu as pltpu


# --------------------------------------------------------------------------- #
# Tiling helpers
# --------------------------------------------------------------------------- #
def _vmem_capacity_bytes():
    """Physical VMEM of the running chip; conservative fallback (v7x per-TC)."""
    try:
        return int(pltpu.get_tpu_info().vmem_capacity_bytes)
    except Exception:
        return 64 << 20


def _per_lane_bytes(c_new, c_old, x_dtype, t_dtype, mask_dtype):
    in_b = c_new * jnp.dtype(x_dtype).itemsize + c_old * jnp.dtype(t_dtype).itemsize
    if mask_dtype is not None:
        in_b += jnp.dtype(mask_dtype).itemsize
    # f32 intermediates inside the kernel: p (c_new), et + d (2*c_old) and a
    # handful of (1, T) rows (xmax, sums, out_bkg, loss, scratch acc, ...).
    interm_b = (c_new + 2 * c_old + 8) * 4
    return in_b, interm_b


def _pick_tile_hw(hw, in_bytes_per_lane, interm_bytes_per_lane, vmem_cap,
                  max_tile=32768):
    """Largest lane tile (multiple of 128) whose double-buffered inputs plus the
    in-kernel f32 intermediates stay within ~1/4 of physical VMEM."""
    if hw <= 128:
        return hw                                  # single full-extent block
    budget = vmem_cap // 4
    per_lane = 2 * in_bytes_per_lane + interm_bytes_per_lane
    tile = min(budget // max(per_lane, 1), max_tile)
    if tile >= hw:
        return hw                                  # full extent (no 128 rule)
    return max(128, (tile // 128) * 128)


# --------------------------------------------------------------------------- #
# Kernel
# --------------------------------------------------------------------------- #
def _make_ukd_kernel(*, c_old, c_new, alpha, has_mask, accumulate,
                     tile_hw, hw, tiles_per_chunk, needs_tail):
    inv_c_old = 1.0 / float(c_old)
    tiny = float(jnp.finfo(jnp.float32).tiny)

    def kernel(*refs):
        if accumulate:
            if has_mask:
                x_ref, t_ref, m_ref, out_ref, acc_ref = refs
            else:
                x_ref, t_ref, out_ref, acc_ref = refs
                m_ref = None
        else:
            if has_mask:
                x_ref, t_ref, m_ref, out_ref = refs
            else:
                x_ref, t_ref, out_ref = refs
                m_ref = None
            acc_ref = None

        x = x_ref[...].astype(jnp.float32)                         # (C_new, T)
        t = t_ref[...].astype(jnp.float32) * jnp.float32(alpha)    # (C_old, T)

        # ---- one shared exp pass feeds BOTH logsumexps (EUP saver) -------- #
        xmax = jnp.max(x, axis=0, keepdims=True)                   # (1, T)
        p = jnp.exp(x - xmax)                                      # (C_new, T)
        sum_all = jnp.sum(p, axis=0, keepdims=True)                # (1, T)
        lse_all = jnp.log(sum_all)                                 # den - xmax

        # Background / new-class channels: {0} ∪ {C_old..C_new-1} (static slices,
        # no iota mask).  With the shared max, sum_bkg can underflow to 0 when
        # every bkg/new logit is ~88+ below the global max; clamp so out_bkg
        # stays a large finite negative instead of -inf.
        sum_bkg = p[0:1, :] + jnp.sum(p[c_old:, :], axis=0, keepdims=True)
        out_bkg = jnp.log(jnp.maximum(sum_bkg, tiny)) - lse_all    # (1, T)

        # Teacher soft labels, kept UNnormalized (single reciprocal at the end).
        tmax = jnp.max(t, axis=0, keepdims=True)
        et = jnp.exp(t - tmax)                                     # (C_old, T)
        sum_et = jnp.sum(et, axis=0, keepdims=True)                # (1, T)

        d = x[:c_old, :] - (lse_all + xmax)                        # x_old - den
        term_all = jnp.sum(et * d, axis=0, keepdims=True)          # incl. c = 0
        num = et[0:1, :] * (out_bkg - d[0:1, :]) + term_all        # drop c=0 term
        loss = num * pl.reciprocal(sum_et, approx=False) * jnp.float32(inv_c_old)

        if m_ref is not None:
            loss = loss * m_ref[...].astype(jnp.float32)

        if needs_tail:
            # cdiv grid: zero padded lanes (use where, not *, so garbage/NaN in
            # OOB-read lanes never leaks into the reduction).
            if accumulate:
                tile_idx = pl.program_id(1) * tiles_per_chunk + pl.program_id(2)
            else:
                tile_idx = pl.program_id(1)
            lane = lax.broadcasted_iota(jnp.int32, loss.shape, 1)
            loss = jnp.where(tile_idx * tile_hw + lane < hw, loss, 0.0)

        if accumulate:
            # Lane-wise running sum in VMEM scratch; cross-lane reduce + output
            # write deferred to the last HW tile (one XLU reduce per chunk).
            @pl.when(pl.program_id(2) == 0)
            def _():
                acc_ref[...] = jnp.zeros_like(acc_ref)

            acc_ref[...] += loss

            @pl.when(pl.program_id(2) == pl.num_programs(2) - 1)
            def _():
                out_ref[...] = jnp.sum(acc_ref[...], keepdims=True)
        else:
            out_ref[...] = -loss                                    # 'none' path

    return kernel


# --------------------------------------------------------------------------- #
# Wrapper
# --------------------------------------------------------------------------- #
def unbiased_kd_loss(inputs, targets, mask=None, reduction="mean", alpha=1.0,
                     tile_hw=None):
    """Matches UnbiasedKnowledgeDistillationLoss.forward for NCHW inputs."""
    N, c_new, H, W = inputs.shape
    n2, c_old, h2, w2 = targets.shape
    assert (n2, h2, w2) == (N, H, W)
    assert c_new > c_old, "inputs must have new classes beyond the target classes"
    HW = H * W

    x = inputs.reshape(N, c_new, HW)
    t = targets.reshape(N, c_old, HW)
    m = None if mask is None else mask.reshape(N, 1, HW)   # no dtype cast here

    vmem_cap = _vmem_capacity_bytes()
    in_b, interm_b = _per_lane_bytes(c_new, c_old, x.dtype, t.dtype,
                                     None if m is None else m.dtype)
    if tile_hw is None:
        tile_hw = _pick_tile_hw(HW, in_b, interm_b, vmem_cap)
    assert tile_hw == HW or tile_hw % 128 == 0

    n_blocks = -(-HW // tile_hw)                         # cdiv
    reduce_sum = reduction in ("mean", "sum")

    # VMEM limit: per-step footprint estimate + headroom, never > ~90% physical.
    est = tile_hw * (2 * in_b + interm_b) + (4 << 20)
    vmem_limit = int(min(vmem_cap * 9 // 10, max(est, 32 << 20)))

    if reduce_sum:
        # Split HW tiles into parallel chunks when the batch alone cannot keep
        # both v7x TensorCores busy.  Partial per-chunk sums are summed below.
        n_chunks = 2 if (N == 1 and n_blocks >= 2) else 1
        tiles_per_chunk = -(-n_blocks // n_chunks)
        needs_tail = (n_chunks * tiles_per_chunk * tile_hw) != HW
        last_blk = n_blocks - 1

        def lane_blk(c, j):
            b = c * tiles_per_chunk + j
            return jnp.minimum(b, last_blk) if needs_tail else b

        in_specs = [
            pl.BlockSpec((None, c_new, tile_hw),
                         lambda n, c, j: (n, 0, lane_blk(c, j))),
            pl.BlockSpec((None, c_old, tile_hw),
                         lambda n, c, j: (n, 0, lane_blk(c, j))),
        ]
        args = [x, t]
        if m is not None:
            in_specs.append(pl.BlockSpec((None, 1, tile_hw),
                                         lambda n, c, j: (n, 0, lane_blk(c, j))))
            args.append(m)

        out_shape = jax.ShapeDtypeStruct((N * n_chunks, 1, 1), jnp.float32)
        out_spec = pl.BlockSpec((None, 1, 1),
                                lambda n, c, j: (n * n_chunks + c, 0, 0))
        grid = (N, n_chunks, tiles_per_chunk)
        dims = ("parallel", "parallel", "arbitrary")
        scratch = [pltpu.VMEM((1, tile_hw), jnp.float32)]
    else:
        n_chunks = 1
        tiles_per_chunk = n_blocks
        needs_tail = n_blocks * tile_hw != HW
        in_specs = [
            pl.BlockSpec((None, c_new, tile_hw), lambda n, j: (n, 0, j)),
            pl.BlockSpec((None, c_old, tile_hw), lambda n, j: (n, 0, j)),
        ]
        args = [x, t]
        if m is not None:
            in_specs.append(pl.BlockSpec((None, 1, tile_hw),
                                         lambda n, j: (n, 0, j)))
            args.append(m)
        out_shape = jax.ShapeDtypeStruct((N, 1, HW), jnp.float32)
        out_spec = pl.BlockSpec((None, 1, tile_hw), lambda n, j: (n, 0, j))
        grid = (N, n_blocks)
        dims = ("parallel", "parallel")
        scratch = []

    kernel = _make_ukd_kernel(c_old=c_old, c_new=c_new, alpha=float(alpha),
                              has_mask=m is not None, accumulate=reduce_sum,
                              tile_hw=tile_hw, hw=HW,
                              tiles_per_chunk=tiles_per_chunk,
                              needs_tail=needs_tail)

    out = pl.pallas_call(
        kernel,
        out_shape=out_shape,
        grid_spec=pltpu.PrefetchScalarGridSpec(
            num_scalar_prefetch=0,
            grid=grid,
            in_specs=in_specs,
            out_specs=out_spec,
            scratch_shapes=scratch,
        ),
        compiler_params=pltpu.CompilerParams(
            dimension_semantics=dims, vmem_limit_bytes=vmem_limit),
    )(*args)

    if reduction == "mean":
        return -(jnp.sum(out) / jnp.float32(N * HW))
    elif reduction == "sum":
        return -jnp.sum(out)
    else:
        return out.reshape(N, H, W)   # already negated per-pixel in the kernel


# --------------------------------------------------------------------------- #
# Pure-JAX reference + tests
# --------------------------------------------------------------------------- #
def _reference(inputs, targets, mask=None, reduction="mean", alpha=1.0):
    c_old = targets.shape[1]
    t = targets * alpha
    den = jax.scipy.special.logsumexp(inputs, axis=1)            # (N, H, W)
    outputs_no_bkg = inputs[:, 1:c_old] - den[:, None]
    bkg = jnp.concatenate([inputs[:, 0:1], inputs[:, c_old:]], axis=1)
    outputs_bkg = jax.scipy.special.logsumexp(bkg, axis=1) - den
    labels = jax.nn.softmax(t, axis=1)
    loss = (labels[:, 0] * outputs_bkg +
            jnp.sum(labels[:, 1:] * outputs_no_bkg, axis=1)) / c_old
    if mask is not None:
        loss = loss * mask.astype(jnp.float32)
    if reduction == "mean":
        return -jnp.mean(loss)
    if reduction == "sum":
        return -jnp.sum(loss)
    return -loss


if __name__ == "__main__":
    key = jax.random.PRNGKey(0)
    k1, k2, k3 = jax.random.split(key, 3)

    N, C_OLD, C_NEW, H, W = 2, 4, 7, 16, 16
    inputs = jax.random.normal(k1, (N, C_NEW, H, W), dtype=jnp.float32)
    targets = jax.random.normal(k2, (N, C_OLD, H, W), dtype=jnp.float32)
    mask = (jax.random.uniform(k3, (N, H, W)) > 0.3).astype(jnp.float32)

    checks = []
    for red in ("mean", "sum", "none"):
        for msk in (None, mask):
            out = jax.block_until_ready(
                unbiased_kd_loss(inputs, targets, msk, reduction=red))
            ref = _reference(inputs, targets, msk, reduction=red)
            checks.append(bool(jnp.allclose(out, ref, rtol=1e-4, atol=1e-5)))

    # Multi-tile pipelining + deferred lane-reduce accumulation along HW.
    out_acc = jax.block_until_ready(
        unbiased_kd_loss(inputs, targets, mask, reduction="mean", tile_hw=128))
    checks.append(bool(jnp.allclose(
        out_acc, _reference(inputs, targets, mask, "mean"), rtol=1e-4, atol=1e-5)))
    out_none = jax.block_until_ready(
        unbiased_kd_loss(inputs, targets, mask, reduction="none", tile_hw=128))
    checks.append(bool(jnp.allclose(
        out_none, _reference(inputs, targets, mask, "none"), rtol=1e-4, atol=1e-5)))

    # N = 1: HW tiles split into 2 parallel chunks (v7x megacore) in reduce mode.
    out1 = jax.block_until_ready(
        unbiased_kd_loss(inputs[:1], targets[:1], mask[:1],
                         reduction="mean", tile_hw=128))
    checks.append(bool(jnp.allclose(
        out1, _reference(inputs[:1], targets[:1], mask[:1], "mean"),
        rtol=1e-4, atol=1e-5)))

    # HW not a multiple of the tile: cdiv grid + lane-tail masking (both paths).
    Ht, Wt = 12, 20                      # HW = 240
    it = jax.random.normal(k1, (N, C_NEW, Ht, Wt), dtype=jnp.float32)
    tt = jax.random.normal(k2, (N, C_OLD, Ht, Wt), dtype=jnp.float32)
    out_t = jax.block_until_ready(
        unbiased_kd_loss(it, tt, None, reduction="sum", tile_hw=128))
    checks.append(bool(jnp.allclose(
        out_t, _reference(it, tt, None, "sum"), rtol=1e-4, atol=1e-5)))
    out_tn = jax.block_until_ready(
        unbiased_kd_loss(it, tt, None, reduction="none", tile_hw=128))
    checks.append(bool(jnp.allclose(
        out_tn, _reference(it, tt, None, "none"), rtol=1e-4, atol=1e-5)))

    # N = 1 with an odd tile count → chunk padding path (clamped index_map +
    # fully-masked extra tile).
    Ho, Wo = 16, 24                      # HW = 384 → 3 tiles of 128, 2 chunks
    io = jax.random.normal(k1, (1, C_NEW, Ho, Wo), dtype=jnp.float32)
    to = jax.random.normal(k2, (1, C_OLD, Ho, Wo), dtype=jnp.float32)
    out_o = jax.block_until_ready(
        unbiased_kd_loss(io, to, None, reduction="mean", tile_hw=128))
    checks.append(bool(jnp.allclose(
        out_o, _reference(io, to, None, "mean"), rtol=1e-4, atol=1e-5)))

    assert all(checks), checks
    print("KERNEL_OK")
</pallas_src>

<mosaic_0001>
module attributes {stable_mosaic.version = 11 : i64} {
  func.func @kernel(%arg0: i32, %arg1: i32, %arg2: i32, %arg3: memref<1x7x256xf32, #tpu.memory_space<vmem>>, %arg4: memref<1x4x256xf32, #tpu.memory_space<vmem>>, %arg5: memref<1x1x1xf32, #tpu.memory_space<vmem>>, %arg6: memref<1x256xf32, #tpu.memory_space<vmem>>) attributes {dimension_semantics = [#tpu.dimension_semantics<parallel>, #tpu.dimension_semantics<parallel>, #tpu.dimension_semantics<arbitrary>], iteration_bounds = array<i64: 2, 1, 1>, scalar_prefetch = 0 : i64, scratch_operands = 1 : i64, tpu.core_type = #tpu.core_type<tc>, window_params = [{transform_indices = @transform_0, window_bounds = array<i64: 1, 7, 256>}, {transform_indices = @transform_1, window_bounds = array<i64: 1, 4, 256>}, {transform_indices = @transform_2, window_bounds = array<i64: 1, 1, 1>}]} {
    %c0 = arith.constant 0 : index
    %c0_0 = arith.constant 0 : index
    %c0_1 = arith.constant 0 : index
    %0 = vector.load %arg3[%c0, %c0_0, %c0_1] : memref<1x7x256xf32, #tpu.memory_space<vmem>>, vector<1x7x256xf32>
    %1 = vector.shape_cast %0 : vector<1x7x256xf32> to vector<7x256xf32>
    %c0_2 = arith.constant 0 : index
    %c0_3 = arith.constant 0 : index
    %c0_4 = arith.constant 0 : index
    %2 = vector.load %arg4[%c0_2, %c0_3, %c0_4] : memref<1x4x256xf32, #tpu.memory_space<vmem>>, vector<1x4x256xf32>
    %3 = vector.shape_cast %2 : vector<1x4x256xf32> to vector<4x256xf32>
    %cst = arith.constant 1.000000e+00 : f32
    %4 = vector.broadcast %cst : f32 to vector<4x256xf32>
    %5 = arith.mulf %3, %4 : vector<4x256xf32>
    %cst_5 = arith.constant dense<0xFF800000> : vector<256xf32>
    %6 = vector.multi_reduction <maximumf>, %1, %cst_5 [0] : vector<7x256xf32> to vector<256xf32>
    %7 = vector.shape_cast %6 : vector<256xf32> to vector<1x256xf32>
    %8 = vector.broadcast %7 : vector<1x256xf32> to vector<7x256xf32>
    %9 = arith.subf %1, %8 : vector<7x256xf32>
    %10 = math.exp %9 : vector<7x256xf32>
    %cst_6 = arith.constant dense<0.000000e+00> : vector<256xf32>
    %11 = vector.multi_reduction <add>, %10, %cst_6 [0] : vector<7x256xf32> to vector<256xf32>
    %12 = vector.shape_cast %11 : vector<256xf32> to vector<1x256xf32>
    %13 = math.log %12 : vector<1x256xf32>
    %14 = vector.extract_strided_slice %10 {offsets = [0, 0], sizes = [1, 256], strides = [1, 1]} : vector<7x256xf32> to vector<1x256xf32>
    %15 = vector.extract_strided_slice %10 {offsets = [4, 0], sizes = [3, 256], strides = [1, 1]} : vector<7x256xf32> to vector<3x256xf32>
    %cst_7 = arith.constant dense<0.000000e+00> : vector<256xf32>
    %16 = vector.multi_reduction <add>, %15, %cst_7 [0] : vector<3x256xf32> to vector<256xf32>
    %17 = vector.shape_cast %16 : vector<256xf32> to vector<1x256xf32>
    %18 = arith.addf %14, %17 : vector<1x256xf32>
    %cst_8 = arith.constant 1.17549435E-38 : f32
    %19 = vector.broadcast %cst_8 : f32 to vector<1x256xf32>
    %20 = arith.maximumf %18, %19 : vector<1x256xf32>
    %21 = math.log %20 : vector<1x256xf32>
    %22 = arith.subf %21, %13 : vector<1x256xf32>
    %cst_9 = arith.constant dense<0xFF800000> : vector<256xf32>
    %23 = vector.multi_reduction <maximumf>, %5, %cst_9 [0] : vector<4x256xf32> to vector<256xf32>
    %24 = vector.shape_cast %23 : vector<256xf32> to vector<1x256xf32>
    %25 = vector.broadcast %24 : vector<1x256xf32> to vector<4x256xf32>
    %26 = arith.subf %5, %25 : vector<4x256xf32>
    %27 = math.exp %26 : vector<4x256xf32>
    %cst_10 = arith.constant dense<0.000000e+00> : vector<256xf32>
    %28 = vector.multi_reduction <add>, %27, %cst_10 [0] : vector<4x256xf32> to vector<256xf32>
    %29 = vector.shape_cast %28 : vector<256xf32> to vector<1x256xf32>
    %30 = vector.extract_strided_slice %1 {offsets = [0, 0], sizes = [4, 256], strides = [1, 1]} : vector<7x256xf32> to vector<4x256xf32>
    %31 = arith.addf %13, %7 : vector<1x256xf32>
    %32 = vector.broadcast %31 : vector<1x256xf32> to vector<4x256xf32>
    %33 = arith.subf %30, %32 : vector<4x256xf32>
    %34 = arith.mulf %27, %33 : vector<4x256xf32>
    %cst_11 = arith.constant dense<0.000000e+00> : vector<256xf32>
    %35 = vector.multi_reduction <add>, %34, %cst_11 [0] : vector<4x256xf32> to vector<256xf32>
    %36 = vector.shape_cast %35 : vector<256xf32> to vector<1x256xf32>
    %37 = vector.extract_strided_slice %27 {offsets = [0, 0], sizes = [1, 256], strides = [1, 1]} : vector<4x256xf32> to vector<1x256xf32>
    %38 = vector.extract_strided_slice %33 {offsets = [0, 0], sizes = [1, 256], strides = [1, 1]} : vector<4x256xf32> to vector<1x256xf32>
    %39 = arith.subf %22, %38 : vector<1x256xf32>
    %40 = arith.mulf %37, %39 : vector<1x256xf32>
    %41 = arith.addf %40, %36 : vector<1x256xf32>
    %42 = tpu.reciprocal %29 : vector<1x256xf32> -> vector<1x256xf32>
    %43 = arith.mulf %41, %42 : vector<1x256xf32>
    %cst_12 = arith.constant 2.500000e-01 : f32
    %44 = vector.broadcast %cst_12 : f32 to vector<1x256xf32>
    %45 = arith.mulf %43, %44 : vector<1x256xf32>
    %c0_i32 = arith.constant 0 : i32
    %46 = arith.cmpi eq, %arg2, %c0_i32 : i32
    %47 = arith.extui %46 : i1 to i32
    %c0_i32_13 = arith.constant 0 : i32
    %48 = arith.cmpi ne, %47, %c0_i32_13 : i32
    scf.if %48 {
      %cst_20 = arith.constant 0.000000e+00 : f32
      %55 = vector.broadcast %cst_20 : f32 to vector<1x256xf32>
      %c0_21 = arith.constant 0 : index
      %c0_22 = arith.constant 0 : index
      %56 = vector.load %arg6[%c0_21, %c0_22] : memref<1x256xf32, #tpu.memory_space<vmem>>, vector<1x256xf32>
      tpu.vector_store %arg6[%c0_21, %c0_22], %55 {strides = array<i32>} : memref<1x256xf32, #tpu.memory_space<vmem>>, vector<1x256xf32>,
    } else {
    }
    %c0_14 = arith.constant 0 : index
    %c0_15 = arith.constant 0 : index
    %49 = vector.load %arg6[%c0_14, %c0_15] : memref<1x256xf32, #tpu.memory_space<vmem>>, vector<1x256xf32>
    %50 = arith.addf %49, %45 : vector<1x256xf32>
    %c0_16 = arith.constant 0 : index
    %c0_17 = arith.constant 0 : index
    %51 = vector.load %arg6[%c0_16, %c0_17] : memref<1x256xf32, #tpu.memory_space<vmem>>, vector<1x256xf32>
    tpu.vector_store %arg6[%c0_16, %c0_17], %50 {strides = array<i32>} : memref<1x256xf32, #tpu.memory_space<vmem>>, vector<1x256xf32>,
    %c0_i32_18 = arith.constant 0 : i32
    %52 = arith.cmpi eq, %arg2, %c0_i32_18 : i32
    %53 = arith.extui %52 : i1 to i32
    %c0_i32_19 = arith.constant 0 : i32
    %54 = arith.cmpi ne, %53, %c0_i32_19 : i32
    scf.if %54 {
      %c0_20 = arith.constant 0 : index
      %c0_21 = arith.constant 0 : index
      %55 = vector.load %arg6[%c0_20, %c0_21] : memref<1x256xf32, #tpu.memory_space<vmem>>, vector<1x256xf32>
      %56 = vector.shape_cast %55 : vector<1x256xf32> to vector<1x1x256xf32>
      %cst_22 = arith.constant dense<0.000000e+00> : vector<1xf32>
      %57 = vector.multi_reduction <add>, %56, %cst_22 [1, 2] : vector<1x1x256xf32> to vector<1xf32>
      %58 = vector.shape_cast %57 : vector<1xf32> to vector<1x1x1xf32>
      %59 = vector.extract %58[0, 0, 0] : f32 from vector<1x1x1xf32>
      %60 = vector.broadcast %59 : f32 to vector<1x1xf32>
      %c0_23 = arith.constant 0 : index
      %c0_24 = arith.constant 0 : index
      %c0_25 = arith.constant 0 : index
      %61 = vector.load %arg5[%c0_23, %c0_24, %c0_25] : memref<1x1x1xf32, #tpu.memory_space<vmem>>, vector<1x1x1xf32>
      %62 = vector.shape_cast %61 : vector<1x1x1xf32> to vector<1x1xf32>
      %63 = vector.shape_cast %60 : vector<1x1xf32> to vector<1x1x1xf32>
      tpu.vector_store %arg5[%c0_23, %c0_24, %c0_25], %63 {strides = array<i32>} : memref<1x1x1xf32, #tpu.memory_space<vmem>>, vector<1x1x1xf32>,
    } else {
    }
    return
  }
  func.func @transform_0(%arg0: i32, %arg1: i32, %arg2: i32) -> (i32, i32, i32) {
    %c1_i32 = arith.constant 1 : i32
    %0 = arith.muli %arg1, %c1_i32 : i32
    %1 = arith.addi %0, %arg2 : i32
    %c0_i32 = arith.constant 0 : i32
    %c0_i32_0 = arith.constant 0 : i32
    return %arg0, %c0_i32, %1 : i32, i32, i32
  }
  func.func @transform_1(%arg0: i32, %arg1: i32, %arg2: i32) -> (i32, i32, i32) {
    %c1_i32 = arith.constant 1 : i32
    %0 = arith.muli %arg1, %c1_i32 : i32
    %1 = arith.addi %0, %arg2 : i32
    %c0_i32 = arith.constant 0 : i32
    %c0_i32_0 = arith.constant 0 : i32
    return %arg0, %c0_i32, %1 : i32, i32, i32
  }
  func.func @transform_2(%arg0: i32, %arg1: i32, %arg2: i32) -> (i32, i32, i32) {
    %c1_i32 = arith.constant 1 : i32
    %0 = arith.muli %arg0, %c1_i32 : i32
    %1 = arith.addi %0, %arg1 : i32
    %c0_i32 = arith.constant 0 : i32
    %c0_i32_0 = arith.constant 0 : i32
    %c0_i32_1 = arith.constant 0 : i32
    return %1, %c0_i32, %c0_i32_0 : i32, i32, i32
  }
}

</mosaic_0001>

<llo_original>
// kernel: tpu_custom_call.1
$region0: #{tpu_custom_call.1}
  #allocation0 [shape = 'u32[]', space=smem, size = 0x4, offset = 0x4, fixed_abs, tag = 'smem constant byte address 0x4 - core index']
  #allocation1 [shape = 'u32[72,128]{1,0:T(1,128)}', space=vmem, size = 0x9000, scoped, tag = 'internal scratch']
  #allocation2 [shape = 'f32[1,256]{1,0:T(1,128)}', space=vmem, size = 0x400, scoped, tag = 'scratch operand']
  %s0 = inlined_call_operand.vmem [shape: f32[2,7,256], index: 0, kind: input, shape index: {}]
  %s1 = inlined_call_operand.vmem [shape: f32[2,4,256], index: 1, kind: input, shape index: {}]
  %s2 = inlined_call_operand.vmem [shape: f32[2,1,1], index: 2, kind: output, shape index: {}]
  %s3 = sld [smem:[#allocation0]]
  $region49: #{tpu_custom_call.1} parent=0
    _
  %s5 = ssub.s32 1, %s3
  %s6 = scalar_select 0, %s5, %s3
  loop: start=0, step=1, limit=4
  $region2: #{tpu_custom_call.1} parent=0 // loop_pre_header
    _
  $region3: #{tpu_custom_call.1} parent=0 // loop_header
    %s8 = sphi 0, %s12
    %p9 = scmp.ge.s32.totalorder %s8, 4
    %s15 = sphi 0, %s34
    %s16 = sphi 0, %s30
    %s17 = sphi 0, %s26
    %s18 = sphi 0, %s15
    %s19 = sphi 0, %s16
    %s20 = sphi 0, %s17
    %s21 = sphi 0, %s18
    %s22 = sphi 0, %s19
    %s23 = sphi 0, %s20
    %s41 = sphi 0, %s43
    %s44 = sphi 0, %s41
    %s45 = sphi 0, %s44
    %s61 = sphi 0, %s45
    %s71 = sphi 0, %s73
    %s74 = sphi 0, %s71
    %s75 = sphi 0, %s74
    %s91 = sphi 0, %s75
    %s99 = sphi 0, %s101
    %s102 = sphi 0, %s99
    %s103 = sphi 0, %s102
    %s119 = sphi 0, %s103
  $region4: #{tpu_custom_call.1} parent=0 // loop_header_branch
    %11 = sbr.rel (%p9) target = $region8
  $region5: #{tpu_custom_call.1} parent=0 // loop_body
    %s13 = ssub.s32 %s8, 1
    %s14 = ssub.s32 %s8, 2
    %s24 = sadd.s32 1, %s17
    %p25 = scmp.ge.s32.totalorder %s24, 1
    %s26 = scalar_select %p25, 0, %s24
    %s27 = sadd.s32 1, %s16
    %s28 = scalar_select %p25, %s27, %s16
    %p29 = scmp.ge.s32.totalorder %s28, 1
    %s30 = scalar_select %p29, 0, %s28
    %s31 = sadd.s32 1, %s15
    %s32 = scalar_select %p29, %s31, %s15
    %p33 = scmp.ge.s32.totalorder %s32, 2
    %s34 = scalar_select %p33, 0, %s32
    %s35 = sadd.s32 %s16, %s17
    %s36 = sadd.s32 %s30, %s26
    %s37 = ssub.s32 %s15, %s34
    %s38 = ssub.s32 %s35, %s36
    %s39 = sor.u32 %s37, %s38
    %p40 = scmp.eq.s32.totalorder %s39, 0
    %s42 = sadd.s32 %s41, 1
    %s43 = scalar_select %p40, %s41, %s42
    %p46 = pneg %p40
    %p47 = scmp.eq.s32.totalorder %s8, 1
    %p48 = por %p46, %p47
    %p49 = scmp.ne.s32.totalorder %s41, %s44
    %p50 = scmp.eq.s32.totalorder %s8, 0
    %p51 = por %p49, %p50
    %p52 = scmp.ne.s32.totalorder %s41, %s44
    %p53 = scmp.eq.s32.totalorder %s13, 1
    %p54 = por %p52, %p53
    %p55 = scmp.ne.s32.totalorder %s44, %s45
    %p56 = scmp.eq.s32.totalorder %s13, 0
    %p57 = por %p55, %p56
    %p58 = scmp.ne.s32.totalorder %s44, %s45
    %p59 = scmp.eq.s32.totalorder %s14, 1
    %p60 = por %p58, %p59
    %p62 = scmp.ne.s32.totalorder %s45, %s61
    %p63 = scmp.eq.s32.totalorder %s14, 0
    %p64 = por %p62, %p63
    %s65 = sadd.s32 %s16, %s17
    %s66 = sadd.s32 %s30, %s26
    %s67 = ssub.s32 %s15, %s34
    %s68 = ssub.s32 %s65, %s66
    %s69 = sor.u32 %s67, %s68
    %p70 = scmp.eq.s32.totalorder %s69, 0
    %s72 = sadd.s32 %s71, 1
    %s73 = scalar_select %p70, %s71, %s72
    %p76 = pneg %p70
    %p77 = scmp.eq.s32.totalorder %s8, 1
    %p78 = por %p76, %p77
    %p79 = scmp.ne.s32.totalorder %s71, %s74
    %p80 = scmp.eq.s32.totalorder %s8, 0
    %p81 = por %p79, %p80
    %p82 = scmp.ne.s32.totalorder %s71, %s74
    %p83 = scmp.eq.s32.totalorder %s13, 1
    %p84 = por %p82, %p83
    %p85 = scmp.ne.s32.totalorder %s74, %s75
    %p86 = scmp.eq.s32.totalorder %s13, 0
    %p87 = por %p85, %p86
    %p88 = scmp.ne.s32.totalorder %s74, %s75
    %p89 = scmp.eq.s32.totalorder %s14, 1
    %p90 = por %p88, %p89
    %p92 = scmp.ne.s32.totalorder %s75, %s91
    %p93 = scmp.eq.s32.totalorder %s14, 0
    %p94 = por %p92, %p93
    %s95 = sadd.s32 %s15, %s16
    %s96 = sadd.s32 %s34, %s30
    %s97 = ssub.s32 %s95, %s96
    %p98 = scmp.eq.s32.totalorder %s97, 0
    %s100 = sadd.s32 %s99, 1
    %s101 = scalar_select %p98, %s99, %s100
    %p104 = pneg %p98
    %p105 = scmp.eq.s32.totalorder %s8, 1
    %p106 = por %p104, %p105
    %p107 = scmp.ne.s32.totalorder %s99, %s102
    %p108 = scmp.eq.s32.totalorder %s8, 0
    %p109 = por %p107, %p108
    %p110 = scmp.ne.s32.totalorder %s99, %s102
    %p111 = scmp.eq.s32.totalorder %s13, 1
    %p112 = por %p110, %p111
    %p113 = scmp.ne.s32.totalorder %s102, %s103
    %p114 = scmp.eq.s32.totalorder %s13, 0
    %p115 = por %p113, %p114
    %p116 = scmp.ne.s32.totalorder %s102, %s103
    %p117 = scmp.eq.s32.totalorder %s14, 1
    %p118 = por %p116, %p117
    %p120 = scmp.ne.s32.totalorder %s103, %s119
    %p121 = scmp.eq.s32.totalorder %s14, 0
    %p122 = por %p120, %p121
    %p123 = scmp.le.s32.totalorder 1, %s8
    %p124 = scmp.lt.s32.totalorder %s8, 3
    %p125 = pnand %p123, %p124
    %p126 = pneg %p125
    // Predicated region
    $region9: #{tpu_custom_call.1} parent=5 // pred_check
      _
    $region10: #{tpu_custom_call.1} parent=5 // pred_check_branch
      %128 = sbr.rel (%p125) target = $region12
    $region11: #{tpu_custom_call.1} parent=5 // pred_region
      %s129 = ssub.s32 %s8, 1
    $region12: #{tpu_custom_call.1} parent=5 // pred_fallthru
      _
    %p130 = scmp.lt.s32.totalorder %s8, 2
    // Predicated region
    $region13: #{tpu_custom_call.1} parent=5 // pred_check
      %p131 = pneg %p130
    $region14: #{tpu_custom_call.1} parent=5 // pred_check_branch
      %133 = sbr.rel (%p131) target = $region16
    $region15: #{tpu_custom_call.1} parent=5 // pred_region
      // Predicated region
      $region17: #{tpu_custom_call.1} parent=15 // pred_check
        %p134 = pneg %p51
      $region18: #{tpu_custom_call.1} parent=15 // pred_check_branch
        %136 = sbr.rel (%p134) target = $region20
      $region19: #{tpu_custom_call.1} parent=15 // pred_region
        %s137 = sadd.s32 %s16, %s17
        %s138 = smul.u32 2, %s137
        %p139 = scmp.lt.s32.totalorder %s15, 1
        %s140 = scalar_select %p139, %s15, 1
        %p141 = scmp.lt.s32.totalorder %s138, 1
        %s142 = scalar_select %p141, %s138, 1
        %s143 = smul.addr %s140, 2
        %s144 = sadd.s32 %s142, %s143
        %s145 = smul.addr %s144, 8
        %s146 = scalar_lea.vmem %s0, %s145
        %s147 = sadd.s32 %s16, %s17
        %s148 = smul.u32 2, %s147
      $region20: #{tpu_custom_call.1} parent=15 // pred_fallthru
        _
      // Predicated region
      $region21: #{tpu_custom_call.1} parent=15 // pred_check
        %p149 = pneg %p81
      $region22: #{tpu_custom_call.1} parent=15 // pred_check_branch
        %151 = sbr.rel (%p149) target = $region24
      $region23: #{tpu_custom_call.1} parent=15 // pred_region
        %s152 = sadd.s32 %s16, %s17
        %s153 = smul.u32 2, %s152
        %p154 = scmp.lt.s32.totalorder %s15, 1
        %s155 = scalar_select %p154, %s15, 1
        %p156 = scmp.lt.s32.totalorder %s153, 1
        %s157 = scalar_select %p156, %s153, 1
        %s158 = smul.addr %s155, 2
        %s159 = sadd.s32 %s157, %s158
        %s160 = smul.addr %s159, 4
        %s161 = scalar_lea.vmem %s1, %s160
        %s162 = sadd.s32 %s16, %s17
        %s163 = smul.u32 2, %s162
      $region24: #{tpu_custom_call.1} parent=15 // pred_fallthru
        _
    $region16: #{tpu_custom_call.1} parent=5 // pred_fallthru
      _
    %p164 = scmp.le.s32.totalorder 1, %s8
    %p165 = scmp.lt.s32.totalorder %s8, 3
    %p166 = pnand %p164, %p165
    %p167 = pneg %p166
    // Predicated region
    $region25: #{tpu_custom_call.1} parent=5 // pred_check
      _
    $region26: #{tpu_custom_call.1} parent=5 // pred_check_branch
      %169 = sbr.rel (%p166) target = $region28
    $region27: #{tpu_custom_call.1} parent=5 // pred_region
      %s170 = ssub.s32 %s8, 1
      %s171 = sadd.s32 %s19, %s20
      %s172 = smul.u32 2, %s171
      %p173 = scmp.lt.s32.totalorder %s18, 1
      %s174 = scalar_select %p173, %s18, 1
      %p175 = scmp.lt.s32.totalorder %s172, 1
      %s176 = scalar_select %p175, %s172, 1
      %s177 = smul.addr %s174, 2
      %s178 = sadd.s32 %s176, %s177
      %s179 = smul.addr %s178, 8
      %s180 = scalar_lea.vmem %s0, %s179
      %p181 = pneg %p57
      %p182 = pneg %p54
      %s183 = sadd.s32 %s19, %s20
      %s184 = smul.u32 2, %s183
      %p185 = scmp.lt.s32.totalorder %s18, 1
      %s186 = scalar_select %p185, %s18, 1
      %p187 = scmp.lt.s32.totalorder %s184, 1
      %s188 = scalar_select %p187, %s184, 1
      %s189 = smul.addr %s186, 2
      %s190 = sadd.s32 %s188, %s189
      %s191 = smul.addr %s190, 4
      %s192 = scalar_lea.vmem %s1, %s191
      %p193 = pneg %p87
      %p194 = pneg %p84
      %p195 = pneg %p115
      %p196 = pneg %p112
      %s197 = sadd.s32 %s18, %s19
      %p198 = scmp.lt.s32.totalorder %s197, 1
      %s199 = scalar_select %p198, %s197, 1
      %s200 = scalar_lea.vmem %s2, %s199
      %s201 = sadd.s32 %s19, %s20
      %s202 = smul.u32 2, %s201
      %p203 = scmp.lt.s32.totalorder %s18, 1
      %s204 = scalar_select %p203, %s18, 1
      %p205 = scmp.lt.s32.totalorder %s202, 1
      %s206 = scalar_select %p205, %s202, 1
      %s207 = smul.addr %s204, 2
      %s208 = sadd.s32 %s206, %s207
      %s209 = smul.addr %s208, 8
      %s210 = scalar_lea.vmem %s0, %s209
      %s211 = sadd.s32 %s19, %s20
      %s212 = smul.u32 2, %s211
      %s213 = sadd.s32 %s19, %s20
      %s214 = smul.u32 2, %s213
      %p215 = scmp.lt.s32.totalorder %s18, 1
      %s216 = scalar_select %p215, %s18, 1
      %p217 = scmp.lt.s32.totalorder %s214, 1
      %s218 = scalar_select %p217, %s214, 1
      %s219 = smul.addr %s216, 2
      %s220 = sadd.s32 %s218, %s219
      %s221 = smul.addr %s220, 4
      %s222 = scalar_lea.vmem %s1, %s221
      %s223 = sadd.s32 %s19, %s20
      %s224 = smul.u32 2, %s223
      %s225 = sadd.s32 %s18, %s19
      %p226 = scmp.lt.s32.totalorder %s225, 1
      %s227 = scalar_select %p226, %s225, 1
      %s228 = scalar_lea.vmem %s2, %s227
      %s229 = sadd.s32 %s18, %s19
      %v230 = vld [vmem:[%s210] sm:$0x7f]
      %v231 = vld [vmem:[%s210 + $0x8] sm:$0x7f]
      %v232 = vld [vmem:[%s222] sm:$0xff]
      %vm233 = vcmask 1046528
      %v234 = vsel %vm233, %v230, -inf
      %v235 = vrot.slane %v234, 4
      %v236 = vmax.f32 %v234, %v235
      %v237 = vrot.slane %v236, 2
      %v238 = vmax.f32 %v236, %v237
      %v239 = vrot.slane %v238, 1
      %v240 = vmax.f32 %v238, %v239
      %v241 = vsel %vm233, %v231, -inf
      %v242 = vrot.slane %v241, 4
      %v243 = vmax.f32 %v241, %v242
      %v244 = vrot.slane %v243, 2
      %v245 = vmax.f32 %v243, %v244
      %v246 = vrot.slane %v245, 1
      %v247 = vmax.f32 %v245, %v246
      %v248 = vsub.f32 %v230, %v240
      %v249 = vsub.f32 %v231, %v247
      %v250 = vmul.f32 %v248, 1.442695
      %v251 = vpow.pop %v250
      %v252 = vmul.f32 %v249, 1.442695
      %v253 = vpow.pop %v252
      %v254 = vsel %vm233, %v251, 0.0
      %v255 = vrot.slane %v254, 4
      %v256 = vadd.f32 %v254, %v255
      %v257 = vrot.slane %v256, 2
      %v258 = vadd.f32 %v256, %v257
      %v259 = vrot.slane %v258, 1
      %v260 = vadd.f32 %v258, %v259
      %v261 = vsel %vm233, %v253, 0.0
      %v262 = vrot.slane %v261, 4
      %v263 = vadd.f32 %v261, %v262
      %v264 = vrot.slane %v263, 2
      %v265 = vadd.f32 %v263, %v264
      %v266 = vrot.slane %v265, 1
      %v267 = vadd.f32 %v265, %v266
      %v268 = vlog2.pop %v260
      %v269 = vmul.f32 %v268, 0.6931472
      %v270 = vlog2.pop %v267
      %v271 = vmul.f32 %v270, 0.6931472
      %v274 = vrot.slane %v251, 4
      %v275 = vrot.slane %v253, 4
      %vm278 = vcmask 1042432
      %v279 = vsel %vm278, %v274, 0.0
      %v280 = vrot.slane %v279, 4
      %v281 = vadd.f32 %v279, %v280
      %v282 = vrot.slane %v281, 2
      %v283 = vadd.f32 %v281, %v282
      %v284 = vrot.slane %v283, 1
      %v285 = vadd.f32 %v283, %v284
      %v286 = vsel %vm278, %v275, 0.0
      %v287 = vrot.slane %v286, 4
      %v288 = vadd.f32 %v286, %v287
      %v289 = vrot.slane %v288, 2
      %v290 = vadd.f32 %v288, %v289
      %v291 = vrot.slane %v290, 1
      %v292 = vadd.f32 %v290, %v291
      %v293 = vadd.f32 %v251, %v285
      %v294 = vadd.f32 %v253, %v292
      %v295 = vmax.f32 %v293, 1.1754944e-38
      %v296 = vmax.f32 %v294, 1.1754944e-38
      %v297 = vlog2.pop %v295
      %v298 = vmul.f32 %v297, 0.6931472
      %v299 = vlog2.pop %v296
      %v300 = vmul.f32 %v299, 0.6931472
      %v301 = vsub.f32 %v298, %v269
      %v302 = vsub.f32 %v300, %v271
      %304 = vst [vmem:[#allocation1] ss:$2 sm:$0xff] %v232
      %v305 = vld.sshfl [vmem:[#allocation1] sm:$0xff pattern:$0x75316420]
      %v306 = vld.sshfl [vmem:[#allocation1 + $0x8] sm:$0xff pattern:$0x75316420]
      %vm309 = vcmask 1043456
      %v310 = vsel %vm309, %v305, -inf
      %v311 = vrot.slane %v310, 4
      %v312 = vmax.f32 %v310, %v311
      %v313 = vrot.slane %v312, 2
      %v314 = vmax.f32 %v312, %v313
      %v315 = vrot.slane %v314, 1
      %v316 = vmax.f32 %v314, %v315
      %v317 = vsel %vm309, %v306, -inf
      %v318 = vrot.slane %v317, 4
      %v319 = vmax.f32 %v317, %v318
      %v320 = vrot.slane %v319, 2
      %v321 = vmax.f32 %v319, %v320
      %v322 = vrot.slane %v321, 1
      %v323 = vmax.f32 %v321, %v322
      %v326 = vrot.slane %v323, 4
      %v327 = vsel %vm309, %v316, %v326
      %v329 = vsub.f32 %v232, %v327
      %v330 = vmul.f32 %v329, 1.442695
      %v331 = vpow.pop %v330
      %333 = vst [vmem:[#allocation1] ss:$2 sm:$0xff] %v331
      %v334 = vld.sshfl [vmem:[#allocation1] sm:$0xff pattern:$0x75316420]
      %v335 = vld.sshfl [vmem:[#allocation1 + $0x8] sm:$0xff pattern:$0x75316420]
      %v338 = vsel %vm309, %v334, 0.0
      %v339 = vrot.slane %v338, 4
      %v340 = vadd.f32 %v338, %v339
      %v341 = vrot.slane %v340, 2
      %v342 = vadd.f32 %v340, %v341
      %v343 = vrot.slane %v342, 1
      %v344 = vadd.f32 %v342, %v343
      %v345 = vsel %vm309, %v335, 0.0
      %v346 = vrot.slane %v345, 4
      %v347 = vadd.f32 %v345, %v346
      %v348 = vrot.slane %v347, 2
      %v349 = vadd.f32 %v347, %v348
      %v350 = vrot.slane %v349, 1
      %v351 = vadd.f32 %v349, %v350
      %v352 = vadd.f32 %v269, %v240
      %v353 = vadd.f32 %v271, %v247
      %v354 = vsub.f32 %v230, %v352
      %v355 = vsub.f32 %v231, %v353
      %v358 = vrot.slane %v355, 4
      %v359 = vsel %vm309, %v354, %v358
      %v361 = vmul.f32 %v331, %v359
      %363 = vst [vmem:[#allocation1] ss:$2 sm:$0xff] %v361
      %v364 = vld.sshfl [vmem:[#allocation1] sm:$0xff pattern:$0x75316420]
      %v365 = vld.sshfl [vmem:[#allocation1 + $0x8] sm:$0xff pattern:$0x75316420]
      %v368 = vsel %vm309, %v364, 0.0
      %v369 = vrot.slane %v368, 4
      %v370 = vadd.f32 %v368, %v369
      %v371 = vrot.slane %v370, 2
      %v372 = vadd.f32 %v370, %v371
      %v373 = vrot.slane %v372, 1
      %v374 = vadd.f32 %v372, %v373
      %v375 = vsel %vm309, %v365, 0.0
      %v376 = vrot.slane %v375, 4
      %v377 = vadd.f32 %v375, %v376
      %v378 = vrot.slane %v377, 2
      %v379 = vadd.f32 %v377, %v378
      %v380 = vrot.slane %v379, 1
      %v381 = vadd.f32 %v379, %v380
      %v382 = vsub.f32 %v301, %v354
      %v383 = vsub.f32 %v302, %v355
      %v386 = vrot.slane %v383, 4
      %v387 = vsel %vm309, %v382, %v386
      %v389 = vmul.f32 %v331, %v387
      %v392 = vrot.slane %v381, 4
      %v393 = vsel %vm309, %v374, %v392
      %v395 = vadd.f32 %v389, %v393
      %v396 = vrcp.pop %v344
      %v397 = vmul.f32 %v344, %v396
      %v398 = vsub.f32 1.0, %v397
      %v399 = vmul.f32 %v396, %v398
      %v400 = vadd.f32 %v396, %v399
      %vm401 = vweird.f32 %v344
      %vm402 = vweird.f32 %v396
      %vm403 = vmor %vm401, %vm402
      %v404 = vsel %vm403, %v396, %v400
      %v405 = vand.u32 2147483647, %v344
      %vm406 = vcmp.eq.f32.partialorder %v405, 8.507059e+37
      %v407 = vand.u32 %v344, 2147483648
      %v408 = vor.u32 1.1754944e-38, %v407
      %v409 = vsel %vm406, %v408, %v404
      %v410 = vrcp.pop %v351
      %v411 = vmul.f32 %v351, %v410
      %v412 = vsub.f32 1.0, %v411
      %v413 = vmul.f32 %v410, %v412
      %v414 = vadd.f32 %v410, %v413
      %vm415 = vweird.f32 %v351
      %vm416 = vweird.f32 %v410
      %vm417 = vmor %vm415, %vm416
      %v418 = vsel %vm417, %v410, %v414
      %v419 = vand.u32 2147483647, %v351
      %vm420 = vcmp.eq.f32.partialorder %v419, 8.507059e+37
      %v421 = vand.u32 %v351, 2147483648
      %v422 = vor.u32 1.1754944e-38, %v421
      %v423 = vsel %vm420, %v422, %v418
      %v426 = vrot.slane %v423, 4
      %v427 = vsel %vm309, %v409, %v426
      %v429 = vmul.f32 %v395, %v427
      %v430 = vmul.f32 %v429, 0.25
      %p431 = scmp.eq.s32.totalorder %s20, 0
      // Predicated region
      $region29: #{tpu_custom_call.1} parent=27 // pred_check
        %p432 = pneg %p431
      $region30: #{tpu_custom_call.1} parent=27 // pred_check_branch
        %434 = sbr.rel (%p432) target = $region32
      $region31: #{tpu_custom_call.1} parent=27 // pred_region
        %v435 = vlaneseq
        %vm436 = vcmp.ge.s32.totalorder %v435, 0
        %vm437 = vcmp.lt.s32.totalorder %v435, 256
        %vm438 = vmand %vm436, %vm437
        %439 = vst.msk [vmem:[#allocation2] sm:$0x3] %vm438, 0.0
      $region32: #{tpu_custom_call.1} parent=27 // pred_fallthru
        _
      %v440 = vld [vmem:[#allocation2] sm:$0x3]
      %v442 = vrot.slane %v430, 3
      %vm443 = vcmask 1040384
      %v444 = vsel %vm443, %v430, %v442
      %v446 = vadd.f32 %v440, %v444
      %v447 = vlaneseq
      %vm448 = vcmp.ge.s32.totalorder %v447, 0
      %vm449 = vcmp.lt.s32.totalorder %v447, 256
      %vm450 = vmand %vm448, %vm449
      %451 = vst.msk [vmem:[#allocation2] sm:$0x3] %vm450, %v446
      // Predicated region
      $region33: #{tpu_custom_call.1} parent=27 // pred_check
        %p452 = pneg %p431
      $region34: #{tpu_custom_call.1} parent=27 // pred_check_branch
        %454 = sbr.rel (%p452) target = $region36
      $region35: #{tpu_custom_call.1} parent=27 // pred_region
        %v455 = vld [vmem:[#allocation2] sm:$0x3]
        %v457 = vperm.slane %v455, 0
        %v458 = vperm.slane %v455, 1
        %v461 = vsel %vm443, %v457, 0.0
        %v462 = vsel %vm443, %v458, 0.0
        %v463 = vadd.f32 %v461, %v462
        %464 = vadd.xlane.f32.xlu0 %v463
        %v465 = vpop.xlane.xlu0 %464
        %v466 = vrot.slane %v465, 4
        %v467 = vadd.f32 %v465, %v466
        %v468 = vrot.slane %v467, 2
        %v469 = vadd.f32 %v467, %v468
        %v470 = vrot.slane %v469, 1
        %v471 = vadd.f32 %v469, %v470
        %s472 = vtos %v471
        %v473 = vstv %s472
        %vm474 = vcmask 0
        %475 = vst.msk [vmem:[%s228] sm:$0x1] %vm474, %v473
      $region36: #{tpu_custom_call.1} parent=27 // pred_fallthru
        _
      %s476 = sadd.s32 %s18, %s19
      %p477 = scmp.lt.s32.totalorder %s476, 1
      %s478 = scalar_select %p477, %s476, 1
      %s479 = scalar_lea.vmem %s2, %s478
      // Predicated region
      $region37: #{tpu_custom_call.1} parent=27 // pred_check
        %p480 = pneg %p112
      $region38: #{tpu_custom_call.1} parent=27 // pred_check_branch
        %482 = sbr.rel (%p480) target = $region40
      $region39: #{tpu_custom_call.1} parent=27 // pred_region
        %s483 = sadd.s32 %s18, %s19
      $region40: #{tpu_custom_call.1} parent=27 // pred_fallthru
        _
    $region28: #{tpu_custom_call.1} parent=5 // pred_fallthru
      _
    %p484 = scmp.le.s32.totalorder 2, %s8
    // Predicated region
    $region41: #{tpu_custom_call.1} parent=5 // pred_check
      %p485 = pneg %p484
    $region42: #{tpu_custom_call.1} parent=5 // pred_check_branch
      %487 = sbr.rel (%p485) target = $region44
    $region43: #{tpu_custom_call.1} parent=5 // pred_region
      %s488 = ssub.s32 %s8, 2
      // Predicated region
      $region45: #{tpu_custom_call.1} parent=43 // pred_check
        %p489 = pneg %p118
      $region46: #{tpu_custom_call.1} parent=43 // pred_check_branch
        %491 = sbr.rel (%p489) target = $region48
      $region47: #{tpu_custom_call.1} parent=43 // pred_region
        %s492 = sadd.s32 %s21, %s22
        %p493 = scmp.lt.s32.totalorder %s492, 1
        %s494 = scalar_select %p493, %s492, 1
        %s495 = scalar_lea.vmem %s2, %s494
      $region48: #{tpu_custom_call.1} parent=43 // pred_fallthru
        _
    $region44: #{tpu_custom_call.1} parent=5 // pred_fallthru
      _
  $region6: #{tpu_custom_call.1} parent=0 // loop_footer
    %s12 = sadd.s32 1, %s8
  $region7: #{tpu_custom_call.1} parent=0 // loop_footer_branch
    %7 = sbr.rel target = $region3
  $region8: #{tpu_custom_call.1} parent=0 // loop_exit
    _

</llo_original>
